<compile_context>
chip_gen: v7x
topology: tpu7x:2x2x1
jax: 0.10.0
libtpu: 0.0.40
codegen_flags: <defaults>
</compile_context>

<pallas_src>
import jax
import jax.numpy as jnp
from jax.experimental import pallas as pl
from jax.experimental.pallas import tpu as pltpu


def _cross_interaction_kernel(x0_ref, xi_ref, w_ref, b_ref, o_ref):
    # x0_ref, xi_ref, o_ref: (tile_b, D_pad);  w_ref, b_ref: (1, D_pad)
    xi = xi_ref[...].astype(jnp.float32)
    x0 = x0_ref[...].astype(jnp.float32)
    w = w_ref[...].astype(jnp.float32)   # (1, D), broadcasts over batch rows
    b = b_ref[...].astype(jnp.float32)   # (1, D), broadcasts over batch rows
    # (X_i @ w.T): per-row dot product -> (tile_b, 1).  VPU mul + XLU reduce.
    s = jnp.sum(xi * w, axis=-1, keepdims=True)
    o_ref[...] = (s * x0 + b).astype(o_ref.dtype)


def _sublane(itemsize):
    # minimum sublane multiple for packed dtypes
    return {4: 8, 2: 16, 1: 32}.get(itemsize, 8)


def _round_up(x, m):
    return ((x + m - 1) // m) * m


def cross_interaction(x0, xi, weight, bias, *, vmem_budget_bytes=32 * 1024 * 1024):
    """Pallas implementation of CrossInteraction.forward.

    Args:
      x0, xi: (B, D) arrays.
      weight: (1, D) array (the Linear(D, 1) weight matrix).
      bias:   (D,)  array.
    Returns:
      (B, D) array equal to (xi @ weight.T) * x0 + bias.
    """
    B, D = x0.shape
    assert xi.shape == (B, D)
    assert weight.shape == (1, D)
    assert bias.shape == (D,)

    itemsize = jnp.dtype(x0.dtype).itemsize
    sub = _sublane(itemsize)

    # Lane-dense last dim: pad D up to a multiple of 128.
    D_pad = _round_up(D, 128)

    # Size the batch tile against the double-buffered VMEM footprint:
    #   3 streamed arrays (x0, xi, out) x 2 pipeline buffers per row.
    bytes_per_row = 6 * D_pad * itemsize
    tile_b = max(sub, vmem_budget_bytes // max(bytes_per_row, 1))
    tile_b = min(tile_b, 2048)
    tile_b = max(sub, (tile_b // sub) * sub)
    tile_b = min(tile_b, _round_up(B, sub))

    # Prefer >= 2 grid steps so both TensorCores get work on v7x (megacore).
    b_pad = _round_up(B, tile_b)
    if b_pad // tile_b < 2 and b_pad >= 2 * sub:
        tile_b = max(sub, (b_pad // 2 // sub) * sub)
        b_pad = _round_up(B, tile_b)

    pad_b = b_pad - B
    pad_d = D_pad - D
    if pad_b or pad_d:
        x0_p = jnp.pad(x0, ((0, pad_b), (0, pad_d)))
        xi_p = jnp.pad(xi, ((0, pad_b), (0, pad_d)))
    else:
        x0_p, xi_p = x0, xi
    w_p = jnp.pad(weight, ((0, 0), (0, pad_d))) if pad_d else weight
    b_vec = jnp.pad(bias, (0, pad_d)) if pad_d else bias
    b_p = b_vec.reshape(1, D_pad)

    grid = (b_pad // tile_b,)
    data_spec = pl.BlockSpec((tile_b, D_pad), lambda i: (i, 0))
    param_spec = pl.BlockSpec((1, D_pad), lambda i: (0, 0))

    # Keep the VMEM limit above our double-buffered footprint but within every
    # generation's physical VMEM (v7x has only 64 MiB per TC).
    vmem_limit = min(vmem_budget_bytes + 16 * 1024 * 1024, 64 * 1024 * 1024)

    out = pl.pallas_call(
        _cross_interaction_kernel,
        out_shape=jax.ShapeDtypeStruct((b_pad, D_pad), x0.dtype),
        grid_spec=pltpu.PrefetchScalarGridSpec(
            num_scalar_prefetch=0,
            grid=grid,
            in_specs=[data_spec, data_spec, param_spec, param_spec],
            out_specs=data_spec,
        ),
        compiler_params=pltpu.CompilerParams(
            dimension_semantics=("parallel",),
            vmem_limit_bytes=vmem_limit,
        ),
    )(x0_p, xi_p, w_p, b_p)

    if pad_b or pad_d:
        out = out[:B, :D]
    return out


def cross_interaction_ref(x0, xi, weight, bias):
    # Pure-JAX reference matching the PyTorch module.
    return (xi @ weight.T) * x0 + bias


if __name__ == "__main__":
    key = jax.random.PRNGKey(0)
    k0, k1, kw, kb = jax.random.split(key, 4)

    batch, input_dim = 16, 32  # small shapes consistent with forward()

    x0 = jax.random.normal(k0, (batch, input_dim), dtype=jnp.float32)
    xi = jax.random.normal(k1, (batch, input_dim), dtype=jnp.float32)

    # Deterministic parameter init (mirrors nn.Linear(D,1) + zeros bias, but
    # with a nonzero bias so the add path is exercised).
    weight = jax.random.normal(kw, (1, input_dim), dtype=jnp.float32) * 0.1
    bias = jax.random.normal(kb, (input_dim,), dtype=jnp.float32) * 0.01

    out = cross_interaction(x0, xi, weight, bias)
    out = jax.block_until_ready(out)

    ref = cross_interaction_ref(x0, xi, weight, bias)
    assert out.shape == (batch, input_dim)
    assert jnp.allclose(out, ref, atol=1e-5, rtol=1e-5), "mismatch vs reference"

    # Also exercise a ragged batch / non-multiple-of-128 D path with bf16.
    B2, D2 = 37, 200
    kx, ky = jax.random.split(k0)
    x0b = jax.random.normal(kx, (B2, D2), dtype=jnp.bfloat16)
    xib = jax.random.normal(ky, (B2, D2), dtype=jnp.bfloat16)
    wb = (jax.random.normal(kw, (1, D2), dtype=jnp.float32) * 0.1).astype(jnp.bfloat16)
    bb = (jax.random.normal(kb, (D2,), dtype=jnp.float32) * 0.01).astype(jnp.bfloat16)
    out2 = jax.block_until_ready(cross_interaction(x0b, xib, wb, bb))
    ref2 = cross_interaction_ref(
        x0b.astype(jnp.float32), xib.astype(jnp.float32),
        wb.astype(jnp.float32), bb.astype(jnp.float32))
    assert out2.shape == (B2, D2)
    assert jnp.allclose(out2.astype(jnp.float32), ref2, atol=2e-2, rtol=2e-2)

    print("KERNEL_OK")
</pallas_src>

<mosaic_0001>
module attributes {stable_mosaic.version = 11 : i64} {
  func.func @_cross_interaction_kernel(%arg0: i32, %arg1: memref<8x128xf32, #tpu.memory_space<vmem>>, %arg2: memref<8x128xf32, #tpu.memory_space<vmem>>, %arg3: memref<1x128xf32, #tpu.memory_space<vmem>>, %arg4: memref<1x128xf32, #tpu.memory_space<vmem>>, %arg5: memref<8x128xf32, #tpu.memory_space<vmem>>) attributes {dimension_semantics = [#tpu.dimension_semantics<parallel>], iteration_bounds = array<i64: 2>, scalar_prefetch = 0 : i64, scratch_operands = 0 : i64, tpu.core_type = #tpu.core_type<tc>, window_params = [{transform_indices = @transform_0, window_bounds = array<i64: 8, 128>}, {transform_indices = @transform_1, window_bounds = array<i64: 8, 128>}, {pipeline_mode = #tpu.pipeline_mode<synchronous>, transform_indices = @transform_2, window_bounds = array<i64: 1, 128>}, {pipeline_mode = #tpu.pipeline_mode<synchronous>, transform_indices = @transform_3, window_bounds = array<i64: 1, 128>}, {transform_indices = @transform_4, window_bounds = array<i64: 8, 128>}]} {
    %c0 = arith.constant 0 : index
    %c0_0 = arith.constant 0 : index
    %0 = vector.load %arg2[%c0, %c0_0] : memref<8x128xf32, #tpu.memory_space<vmem>>, vector<8x128xf32>
    %c0_1 = arith.constant 0 : index
    %c0_2 = arith.constant 0 : index
    %1 = vector.load %arg1[%c0_1, %c0_2] : memref<8x128xf32, #tpu.memory_space<vmem>>, vector<8x128xf32>
    %c0_3 = arith.constant 0 : index
    %c0_4 = arith.constant 0 : index
    %2 = vector.load %arg3[%c0_3, %c0_4] : memref<1x128xf32, #tpu.memory_space<vmem>>, vector<1x128xf32>
    %c0_5 = arith.constant 0 : index
    %c0_6 = arith.constant 0 : index
    %3 = vector.load %arg4[%c0_5, %c0_6] : memref<1x128xf32, #tpu.memory_space<vmem>>, vector<1x128xf32>
    %4 = vector.broadcast %2 : vector<1x128xf32> to vector<8x128xf32>
    %5 = arith.mulf %0, %4 : vector<8x128xf32>
    %cst = arith.constant dense<0.000000e+00> : vector<8xf32>
    %6 = vector.multi_reduction <add>, %5, %cst [1] : vector<8x128xf32> to vector<8xf32>
    %7 = vector.shape_cast %6 : vector<8xf32> to vector<8x1xf32>
    %8 = vector.broadcast %7 : vector<8x1xf32> to vector<8x128xf32>
    %9 = arith.mulf %8, %1 : vector<8x128xf32>
    %10 = vector.broadcast %3 : vector<1x128xf32> to vector<8x128xf32>
    %11 = arith.addf %9, %10 : vector<8x128xf32>
    %c0_7 = arith.constant 0 : index
    %c0_8 = arith.constant 0 : index
    %12 = vector.load %arg5[%c0_7, %c0_8] : memref<8x128xf32, #tpu.memory_space<vmem>>, vector<8x128xf32>
    tpu.vector_store %arg5[%c0_7, %c0_8], %11 {strides = array<i32>} : memref<8x128xf32, #tpu.memory_space<vmem>>, vector<8x128xf32>,
    return
  }
  func.func @transform_0(%arg0: i32) -> (i32, i32) {
    %c0_i32 = arith.constant 0 : i32
    %c0_i32_0 = arith.constant 0 : i32
    return %arg0, %c0_i32 : i32, i32
  }
  func.func @transform_1(%arg0: i32) -> (i32, i32) {
    %c0_i32 = arith.constant 0 : i32
    %c0_i32_0 = arith.constant 0 : i32
    return %arg0, %c0_i32 : i32, i32
  }
  func.func @transform_2(%arg0: i32) -> (i32, i32) {
    %c0_i32 = arith.constant 0 : i32
    %c0_i32_0 = arith.constant 0 : i32
    %c0_i32_1 = arith.constant 0 : i32
    return %c0_i32, %c0_i32_0 : i32, i32
  }
  func.func @transform_3(%arg0: i32) -> (i32, i32) {
    %c0_i32 = arith.constant 0 : i32
    %c0_i32_0 = arith.constant 0 : i32
    %c0_i32_1 = arith.constant 0 : i32
    return %c0_i32, %c0_i32_0 : i32, i32
  }
  func.func @transform_4(%arg0: i32) -> (i32, i32) {
    %c0_i32 = arith.constant 0 : i32
    %c0_i32_0 = arith.constant 0 : i32
    return %arg0, %c0_i32 : i32, i32
  }
}

</mosaic_0001>

<llo_original>
// kernel: tpu_custom_call.1
$region0: #{tpu_custom_call.1}
  #allocation0 [shape = 'u32[]', space=smem, size = 0x4, offset = 0x4, fixed_abs, tag = 'smem constant byte address 0x4 - core index']
  #allocation1 [shape = 'u32[144,128]{1,0:T(1,128)}', space=vmem, size = 0x12000, scoped, tag = 'internal scratch']
  %s0 = inlined_call_operand.hbm [shape: f32[16,128], index: 0, kind: input, shape index: {}]
  %s1 = inlined_call_operand.hbm [shape: f32[16,128], index: 1, kind: input, shape index: {}]
  %s2 = inlined_call_operand.vmem [shape: f32[1,128], index: 2, kind: input, shape index: {}]
  %s3 = inlined_call_operand.vmem [shape: f32[1,128], index: 3, kind: input, shape index: {}]
  %s4 = inlined_call_operand.hbm [shape: f32[16,128], index: 4, kind: output, shape index: {}]
  %s5 = sld [smem:[#allocation0]]
  $region57: #{tpu_custom_call.1} parent=0
    _
  %s7 = ssub.s32 1, %s5
  %s8 = scalar_select 0, %s7, %s5
  $region1: #{tpu_custom_call.1} parent=0
    #allocation2 [shape = 'u8[8192]{0}', space=vmem, size = 0x2000, scoped, tag = 'input window, operand 0']
    #allocation3 [shape = 's32[2]{0}', space=sflag, size = 0x8, scoped, tag = 'scoped memory for tpu_custom_call.1']
    #allocation4 [shape = 's32[2]{0}', space=sflag, size = 0x8, scoped, tag = 'scoped memory for tpu_custom_call.1']
    #allocation5 [shape = 'u8[8192]{0}', space=vmem, size = 0x2000, scoped, tag = 'input window, operand 1']
    #allocation6 [shape = 's32[2]{0}', space=sflag, size = 0x8, scoped, tag = 'scoped memory for tpu_custom_call.1']
    #allocation7 [shape = 'u8[8192]{0}', space=vmem, size = 0x2000, scoped, tag = 'output window, operand 0']
    %9 = vsyncpa [#allocation3], 0
    %s10 = scalar_lea.sflag [#allocation3], 1
    %11 = vsyncpa %s10, 0
    %12 = vsyncpa [#allocation6], 0
    %s13 = scalar_lea.sflag [#allocation6], 1
    %14 = vsyncpa %s13, 0
    %15 = vsyncpa [#allocation4], 0
    %s16 = scalar_lea.sflag [#allocation4], 1
    %17 = vsyncpa %s16, 0
    loop: start=0, step=1, limit=4
    $region2: #{tpu_custom_call.1} parent=1 // loop_pre_header
      _
    $region3: #{tpu_custom_call.1} parent=1 // loop_header
      %s19 = sphi 0, %s23
      %p20 = scmp.ge.s32.totalorder %s19, 4
      %s29 = sphi 0, %s31
      %s32 = sphi 0, %s29
      %s33 = sphi 0, %s32
      %s49 = sphi 0, %s33
      %s55 = sphi 0, %s57
      %s58 = sphi 0, %s55
      %s59 = sphi 0, %s58
      %s75 = sphi 0, %s59
      %s79 = sphi 0, %s79
      %s81 = sphi 0, %s79
      %s82 = sphi 0, %s81
      %s96 = sphi 0, %s82
      %s100 = sphi 0, %s100
      %s102 = sphi 0, %s100
      %s103 = sphi 0, %s102
      %s117 = sphi 0, %s103
      %s123 = sphi 0, %s125
      %s126 = sphi 0, %s123
      %s127 = sphi 0, %s126
      %s143 = sphi 0, %s127
    $region4: #{tpu_custom_call.1} parent=1 // loop_header_branch
      %22 = sbr.rel (%p20) target = $region8
    $region5: #{tpu_custom_call.1} parent=1 // loop_body
      %s24 = ssub.s32 %s19, 1
      %s25 = ssub.s32 %s19, 2
      %s26 = sadd.s32 %s19, 1
      %s27 = ssub.s32 %s19, %s26
      %p28 = scmp.eq.s32.totalorder %s27, 0
      %s30 = sadd.s32 %s29, 1
      %s31 = scalar_select %p28, %s29, %s30
      %p34 = pneg %p28
      %p35 = scmp.eq.s32.totalorder %s19, 1
      %p36 = por %p34, %p35
      %p37 = scmp.ne.s32.totalorder %s29, %s32
      %p38 = scmp.eq.s32.totalorder %s19, 0
      %p39 = por %p37, %p38
      %p40 = scmp.ne.s32.totalorder %s29, %s32
      %p41 = scmp.eq.s32.totalorder %s24, 1
      %p42 = por %p40, %p41
      %p43 = scmp.ne.s32.totalorder %s32, %s33
      %p44 = scmp.eq.s32.totalorder %s24, 0
      %p45 = por %p43, %p44
      %p46 = scmp.ne.s32.totalorder %s32, %s33
      %p47 = scmp.eq.s32.totalorder %s25, 1
      %p48 = por %p46, %p47
      %p50 = scmp.ne.s32.totalorder %s33, %s49
      %p51 = scmp.eq.s32.totalorder %s25, 0
      %p52 = por %p50, %p51
      %s53 = ssub.s32 %s19, %s26
      %p54 = scmp.eq.s32.totalorder %s53, 0
      %s56 = sadd.s32 %s55, 1
      %s57 = scalar_select %p54, %s55, %s56
      %p60 = pneg %p54
      %p61 = scmp.eq.s32.totalorder %s19, 1
      %p62 = por %p60, %p61
      %p63 = scmp.ne.s32.totalorder %s55, %s58
      %p64 = scmp.eq.s32.totalorder %s19, 0
      %p65 = por %p63, %p64
      %p66 = scmp.ne.s32.totalorder %s55, %s58
      %p67 = scmp.eq.s32.totalorder %s24, 1
      %p68 = por %p66, %p67
      %p69 = scmp.ne.s32.totalorder %s58, %s59
      %p70 = scmp.eq.s32.totalorder %s24, 0
      %p71 = por %p69, %p70
      %p72 = scmp.ne.s32.totalorder %s58, %s59
      %p73 = scmp.eq.s32.totalorder %s25, 1
      %p74 = por %p72, %p73
      %p76 = scmp.ne.s32.totalorder %s59, %s75
      %p77 = scmp.eq.s32.totalorder %s25, 0
      %p78 = por %p76, %p77
      %s80 = sadd.s32 %s79, 1
      %p83 = scmp.eq.s32.totalorder %s19, 1
      %p84 = scmp.ne.s32.totalorder %s79, %s81
      %p85 = scmp.eq.s32.totalorder %s19, 0
      %p86 = por %p84, %p85
      %p87 = scmp.ne.s32.totalorder %s79, %s81
      %p88 = scmp.eq.s32.totalorder %s24, 1
      %p89 = por %p87, %p88
      %p90 = scmp.ne.s32.totalorder %s81, %s82
      %p91 = scmp.eq.s32.totalorder %s24, 0
      %p92 = por %p90, %p91
      %p93 = scmp.ne.s32.totalorder %s81, %s82
      %p94 = scmp.eq.s32.totalorder %s25, 1
      %p95 = por %p93, %p94
      %p97 = scmp.ne.s32.totalorder %s82, %s96
      %p98 = scmp.eq.s32.totalorder %s25, 0
      %p99 = por %p97, %p98
      %s101 = sadd.s32 %s100, 1
      %p104 = scmp.eq.s32.totalorder %s19, 1
      %p105 = scmp.ne.s32.totalorder %s100, %s102
      %p106 = scmp.eq.s32.totalorder %s19, 0
      %p107 = por %p105, %p106
      %p108 = scmp.ne.s32.totalorder %s100, %s102
      %p109 = scmp.eq.s32.totalorder %s24, 1
      %p110 = por %p108, %p109
      %p111 = scmp.ne.s32.totalorder %s102, %s103
      %p112 = scmp.eq.s32.totalorder %s24, 0
      %p113 = por %p111, %p112
      %p114 = scmp.ne.s32.totalorder %s102, %s103
      %p115 = scmp.eq.s32.totalorder %s25, 1
      %p116 = por %p114, %p115
      %p118 = scmp.ne.s32.totalorder %s103, %s117
      %p119 = scmp.eq.s32.totalorder %s25, 0
      %p120 = por %p118, %p119
      %s121 = ssub.s32 %s19, %s26
      %p122 = scmp.eq.s32.totalorder %s121, 0
      %s124 = sadd.s32 %s123, 1
      %s125 = scalar_select %p122, %s123, %s124
      %p128 = pneg %p122
      %p129 = scmp.eq.s32.totalorder %s19, 1
      %p130 = por %p128, %p129
      %p131 = scmp.ne.s32.totalorder %s123, %s126
      %p132 = scmp.eq.s32.totalorder %s19, 0
      %p133 = por %p131, %p132
      %p134 = scmp.ne.s32.totalorder %s123, %s126
      %p135 = scmp.eq.s32.totalorder %s24, 1
      %p136 = por %p134, %p135
      %p137 = scmp.ne.s32.totalorder %s126, %s127
      %p138 = scmp.eq.s32.totalorder %s24, 0
      %p139 = por %p137, %p138
      %p140 = scmp.ne.s32.totalorder %s126, %s127
      %p141 = scmp.eq.s32.totalorder %s25, 1
      %p142 = por %p140, %p141
      %p144 = scmp.ne.s32.totalorder %s127, %s143
      %p145 = scmp.eq.s32.totalorder %s25, 0
      %p146 = por %p144, %p145
      %p147 = scmp.le.s32.totalorder 1, %s19
      %p148 = scmp.lt.s32.totalorder %s19, 3
      %p149 = pnand %p147, %p148
      %p150 = pneg %p149
      // Predicated region
      $region9: #{tpu_custom_call.1} parent=5 // pred_check
        _
      $region10: #{tpu_custom_call.1} parent=5 // pred_check_branch
        %152 = sbr.rel (%p149) target = $region12
      $region11: #{tpu_custom_call.1} parent=5 // pred_region
        %s153 = ssub.s32 %s19, 1
        // Predicated region
        $region13: #{tpu_custom_call.1} parent=11 // pred_check
          %p154 = pneg %p92
        $region14: #{tpu_custom_call.1} parent=11 // pred_check_branch
          %156 = sbr.rel (%p154) target = $region16
        $region15: #{tpu_custom_call.1} parent=11 // pred_region
          _
        $region16: #{tpu_custom_call.1} parent=11 // pred_fallthru
          _
        // Predicated region
        $region17: #{tpu_custom_call.1} parent=11 // pred_check
          %p157 = pneg %p113
        $region18: #{tpu_custom_call.1} parent=11 // pred_check_branch
          %159 = sbr.rel (%p157) target = $region20
        $region19: #{tpu_custom_call.1} parent=11 // pred_region
          _
        $region20: #{tpu_custom_call.1} parent=11 // pred_fallthru
          _
      $region12: #{tpu_custom_call.1} parent=5 // pred_fallthru
        _
      %p160 = scmp.lt.s32.totalorder %s19, 2
      // Predicated region
      $region21: #{tpu_custom_call.1} parent=5 // pred_check
        %p161 = pneg %p160
      $region22: #{tpu_custom_call.1} parent=5 // pred_check_branch
        %163 = sbr.rel (%p161) target = $region24
      $region23: #{tpu_custom_call.1} parent=5 // pred_region
        // Predicated region
        $region25: #{tpu_custom_call.1} parent=23 // pred_check
          %p164 = pneg %p39
        $region26: #{tpu_custom_call.1} parent=23 // pred_check_branch
          %166 = sbr.rel (%p164) target = $region28
        $region27: #{tpu_custom_call.1} parent=23 // pred_region
          %s167 = sand.u32 %s29, 1
          %s168 = scalar_lea.sflag [#allocation3], %s167
          %s169 = sand.u32 %s29, 1
          %s170 = smul.addr %s169, 8
          %s171 = scalar_lea.vmem [#allocation2], %s170
          %s173 = ssub.s32 128, 128
          %174 = vsyncadd %s168, %s173
          %s175 = smul.addr %s19, 128
          %s176 = scalar_lea.hbm %s0, %s175
          %s178 = sshll.u32 %s171, 4
          %s179 = int_to_ptr.vmem [resolvable:$true] %s178
          %181 = dma.hbm_to_vmem [thread:$0]  %s176, 128, %s179, %s168
        $region28: #{tpu_custom_call.1} parent=23 // pred_fallthru
          _
        // Predicated region
        $region29: #{tpu_custom_call.1} parent=23 // pred_check
          %p182 = pneg %p65
        $region30: #{tpu_custom_call.1} parent=23 // pred_check_branch
          %184 = sbr.rel (%p182) target = $region32
        $region31: #{tpu_custom_call.1} parent=23 // pred_region
          %s185 = sand.u32 %s55, 1
          %s186 = scalar_lea.sflag [#allocation6], %s185
          %s187 = sand.u32 %s55, 1
          %s188 = smul.addr %s187, 8
          %s189 = scalar_lea.vmem [#allocation5], %s188
          %s191 = ssub.s32 128, 128
          %192 = vsyncadd %s186, %s191
          %s193 = smul.addr %s19, 128
          %s194 = scalar_lea.hbm %s1, %s193
          %s196 = sshll.u32 %s189, 4
          %s197 = int_to_ptr.vmem [resolvable:$true] %s196
          %199 = dma.hbm_to_vmem [thread:$0]  %s194, 128, %s197, %s186
        $region32: #{tpu_custom_call.1} parent=23 // pred_fallthru
          _
      $region24: #{tpu_custom_call.1} parent=5 // pred_fallthru
        _
      %p200 = scmp.le.s32.totalorder 1, %s19
      %p201 = scmp.lt.s32.totalorder %s19, 3
      %p202 = pnand %p200, %p201
      %p203 = pneg %p202
      // Predicated region
      $region33: #{tpu_custom_call.1} parent=5 // pred_check
        _
      $region34: #{tpu_custom_call.1} parent=5 // pred_check_branch
        %205 = sbr.rel (%p202) target = $region36
      $region35: #{tpu_custom_call.1} parent=5 // pred_region
        %s206 = ssub.s32 %s19, 1
        %s207 = sand.u32 %s32, 1
        %s208 = scalar_lea.sflag [#allocation3], %s207
        %s209 = sand.u32 %s32, 1
        %s210 = smul.addr %s209, 8
        %s211 = scalar_lea.vmem [#allocation2], %s210
        // Predicated region
        $region37: #{tpu_custom_call.1} parent=35 // pred_check
          %p212 = pneg %p45
        $region38: #{tpu_custom_call.1} parent=35 // pred_check_branch
          %214 = sbr.rel (%p212) target = $region40
        $region39: #{tpu_custom_call.1} parent=35 // pred_region
          %215 = dma.done %s208, 128
        $region40: #{tpu_custom_call.1} parent=35 // pred_fallthru
          _
        %s216 = sand.u32 %s58, 1
        %s217 = scalar_lea.sflag [#allocation6], %s216
        %s218 = sand.u32 %s58, 1
        %s219 = smul.addr %s218, 8
        %s220 = scalar_lea.vmem [#allocation5], %s219
        // Predicated region
        $region41: #{tpu_custom_call.1} parent=35 // pred_check
          %p221 = pneg %p71
        $region42: #{tpu_custom_call.1} parent=35 // pred_check_branch
          %223 = sbr.rel (%p221) target = $region44
        $region43: #{tpu_custom_call.1} parent=35 // pred_region
          %224 = dma.done %s217, 128
        $region44: #{tpu_custom_call.1} parent=35 // pred_fallthru
          _
        %s225 = sand.u32 %s32, 1
        %s226 = scalar_lea.sflag [#allocation3], %s225
        %s227 = sand.u32 %s32, 1
        %s228 = smul.addr %s227, 8
        %s229 = scalar_lea.vmem [#allocation2], %s228
        %p230 = pneg %p45
        %p231 = pneg %p42
        %s232 = sand.u32 %s58, 1
        %s233 = scalar_lea.sflag [#allocation6], %s232
        %s234 = sand.u32 %s58, 1
        %s235 = smul.addr %s234, 8
        %s236 = scalar_lea.vmem [#allocation5], %s235
        %p237 = pneg %p71
        %p238 = pneg %p68
        %p239 = pneg %p92
        %p240 = pneg %p89
        %p241 = pneg %p113
        %p242 = pneg %p110
        %p243 = pneg %p139
        %p244 = pneg %p136
        %s245 = sand.u32 %s126, 1
        %s246 = scalar_lea.sflag [#allocation4], %s245
        %s247 = sand.u32 %s126, 1
        %s248 = smul.addr %s247, 8
        %s249 = scalar_lea.vmem [#allocation7], %s248
        %v250 = vld [vmem:[%s220] sm:$0xff]
        %v251 = vld [vmem:[%s211] sm:$0xff]
        %v252 = vld [vmem:[%s2] sm:$0x1]
        %v253 = vld [vmem:[%s3] sm:$0x1]
        %v255 = vlaneseq
        %v256 = vshrl.u32 %v255, 7
        %v257 = vsub.s32 0, %v256
        %v258 = vrot.slane %v252, %v257
        %v260 = vmul.f32 %v250, %v258
        %261 = vadd.xlane.f32.xlu0 %v260
        %v262 = vpop.xlane.xlu0 %261
        %v263 = vmul.f32 %v262, %v251
        %v265 = vlaneseq
        %v266 = vshrl.u32 %v265, 7
        %v267 = vsub.s32 0, %v266
        %v268 = vrot.slane %v253, %v267
        %v270 = vadd.f32 %v263, %v268
        %271 = vst [vmem:[%s249] sm:$0xff] %v270
        %s272 = sand.u32 %s126, 1
        %s273 = scalar_lea.sflag [#allocation4], %s272
        %s274 = sand.u32 %s126, 1
        %s275 = smul.addr %s274, 8
        %s276 = scalar_lea.vmem [#allocation7], %s275
        // Predicated region
        $region45: #{tpu_custom_call.1} parent=35 // pred_check
          %p277 = pneg %p136
        $region46: #{tpu_custom_call.1} parent=35 // pred_check_branch
          %279 = sbr.rel (%p277) target = $region48
        $region47: #{tpu_custom_call.1} parent=35 // pred_region
          %s281 = ssub.s32 128, 128
          %282 = vsyncadd %s273, %s281
          %s283 = smul.addr %s24, 128
          %s284 = scalar_lea.hbm %s4, %s283
          %s286 = sshll.u32 %s276, 4
          %s287 = int_to_ptr.vmem [resolvable:$true] %s286
          %289 = dma.vmem_to_hbm [thread:$0]  %s287, 128, %s284, %s273
        $region48: #{tpu_custom_call.1} parent=35 // pred_fallthru
          _
      $region36: #{tpu_custom_call.1} parent=5 // pred_fallthru
        _
      %p290 = scmp.le.s32.totalorder 2, %s19
      // Predicated region
      $region49: #{tpu_custom_call.1} parent=5 // pred_check
        %p291 = pneg %p290
      $region50: #{tpu_custom_call.1} parent=5 // pred_check_branch
        %293 = sbr.rel (%p291) target = $region52
      $region51: #{tpu_custom_call.1} parent=5 // pred_region
        %s294 = ssub.s32 %s19, 2
        // Predicated region
        $region53: #{tpu_custom_call.1} parent=51 // pred_check
          %p295 = pneg %p142
        $region54: #{tpu_custom_call.1} parent=51 // pred_check_branch
          %297 = sbr.rel (%p295) target = $region56
        $region55: #{tpu_custom_call.1} parent=51 // pred_region
          %s298 = sand.u32 %s127, 1
          %s299 = scalar_lea.sflag [#allocation4], %s298
          %s300 = sand.u32 %s127, 1
          %s301 = smul.addr %s300, 8
          %s302 = scalar_lea.vmem [#allocation7], %s301
          %303 = dma.done %s299, 128
        $region56: #{tpu_custom_call.1} parent=51 // pred_fallthru
          _
      $region52: #{tpu_custom_call.1} parent=5 // pred_fallthru
        _
    $region6: #{tpu_custom_call.1} parent=1 // loop_footer
      %s23 = sadd.s32 1, %s19
    $region7: #{tpu_custom_call.1} parent=1 // loop_footer_branch
      %18 = sbr.rel target = $region3
    $region8: #{tpu_custom_call.1} parent=1 // loop_exit
      _
    %304 = vsyncpa [#allocation3], 1
    %s305 = scalar_lea.sflag [#allocation3], 1
    %306 = vsyncpa %s305, 1
    %307 = vsyncpa [#allocation6], 1
    %s308 = scalar_lea.sflag [#allocation6], 1
    %309 = vsyncpa %s308, 1
    %310 = vsyncpa [#allocation4], 1
    %s311 = scalar_lea.sflag [#allocation4], 1
    %312 = vsyncpa %s311, 1

</llo_original>
